<compile_context>
chip_gen: v7x
topology: tpu7x:2x2x1
jax: 0.10.0
libtpu: 0.0.40
codegen_flags: <defaults>
</compile_context>

<pallas_src>
import jax
import jax.numpy as jnp
from jax import lax
from jax.experimental import pallas as pl
from jax.experimental.pallas import tpu as pltpu


def _ceil_div(a, b):
    return -(-a // b)


def _interp_matrix(out_size, in_size):
    """Row-interpolation matrix for bilinear resize, align_corners=True."""
    if out_size == 1:
        src = jnp.zeros((1,), dtype=jnp.float32)
    else:
        src = jnp.arange(out_size, dtype=jnp.float32) * (
            (in_size - 1) / (out_size - 1))
    i0 = jnp.clip(jnp.floor(src), 0, in_size - 1).astype(jnp.int32)
    i1 = jnp.clip(i0 + 1, 0, in_size - 1)
    w1 = src - i0.astype(jnp.float32)
    w0 = 1.0 - w1
    m = (jax.nn.one_hot(i0, in_size, dtype=jnp.float32) * w0[:, None]
         + jax.nn.one_hot(i1, in_size, dtype=jnp.float32) * w1[:, None])
    return m  # (out_size, in_size)


def _epe_kernel(ah_ref, awt_ref, x_ref, t_ref, o_ref, acc_ref):
    """One grid step: a block of Bb flow slices x one Wt tile of the target."""
    j = pl.program_id(1)
    nj = pl.num_programs(1)

    @pl.when(j == 0)
    def _():
        acc_ref[...] = jnp.zeros_like(acc_ref)

    bb, hi, wi = x_ref.shape
    ht = ah_ref.shape[0]
    wt_t = awt_ref.shape[1]

    # --- W-resize: one big 2-D matmul, batch folded into the rows (MXU). ---
    x2 = x_ref[...].reshape(bb * hi, wi)                        # (Bb*Hi, Wi)
    u1 = jnp.dot(x2, awt_ref[...],
                 preferred_element_type=jnp.float32)            # (Bb*Hi, Wt_t)
    u1 = u1.reshape(bb, hi, wt_t)

    # --- H-resize: batched MXU matmul, A_h shared across the batch block. ---
    ah_b = jnp.broadcast_to(ah_ref[...], (bb, ht, hi))          # (Bb, Ht, Hi)
    up = lax.dot_general(                                       # (Bb, Ht, Wt_t)
        ah_b, u1,
        dimension_numbers=(((2,), (1,)), ((0,), (0,))),
        preferred_element_type=jnp.float32)

    # --- epilogue: partial per-row squared sums for this Wt tile. ---
    diff = up - t_ref[...]
    acc_ref[...] += jnp.sum(diff * diff, axis=-1)               # (Bb, Ht)

    @pl.when(j == nj - 1)
    def _():
        # Lane-dense write of the per-(slice, row) L2 norms for this block.
        o_ref[...] = jnp.sqrt(acc_ref[...])[None, :, :]


def end_point_error(input_flow, target_flow):
    """EPE of one prediction against the target (PyTorch forward semantics)."""
    n, c, hi, wi = input_flow.shape
    tn, tc, ht, wt = target_flow.shape
    assert (n, c) == (tn, tc)
    b = n * c

    a_h = _interp_matrix(ht, hi)            # (Ht, Hi)
    a_wt = _interp_matrix(wt, wi).T         # (Wi, Wt)

    # ---- tiling -------------------------------------------------------------
    # Lane-dense Wt tiles: full width when small, else 512 (multiple of 128).
    wt_tile = wt if wt <= 512 else 512
    wt_pad = _ceil_div(wt, wt_tile) * wt_tile
    # Batch block: as many slices per grid step as fit a ~8 MiB VMEM budget.
    bytes_per_slice = 4 * (3 * ht * wt_tile + 2 * hi * wi
                           + hi * wt_tile + ht * hi + ht)
    bb = int(max(1, min(b, (8 << 20) // bytes_per_slice)))
    bp = _ceil_div(b, bb) * bb
    n_b = bp // bb
    n_wt = wt_pad // wt_tile

    x = input_flow.reshape(b, hi, wi).astype(jnp.float32)
    t = target_flow.reshape(b, ht, wt).astype(jnp.float32)
    if bp != b:          # zero slices contribute exactly 0 to every norm
        x = jnp.pad(x, ((0, bp - b), (0, 0), (0, 0)))
        t = jnp.pad(t, ((0, bp - b), (0, 0), (0, 0)))
    if wt_pad != wt:     # zero columns contribute exactly 0 to the row sums
        t = jnp.pad(t, ((0, 0), (0, 0), (0, wt_pad - wt)))
        a_wt = jnp.pad(a_wt, ((0, 0), (0, wt_pad - wt)))

    norms = pl.pallas_call(
        _epe_kernel,
        out_shape=jax.ShapeDtypeStruct((n_b, bb, ht), jnp.float32),
        grid_spec=pltpu.PrefetchScalarGridSpec(
            num_scalar_prefetch=0,
            grid=(n_b, n_wt),
            in_specs=[
                pl.BlockSpec((ht, hi), lambda i, j: (0, 0)),            # A_h
                pl.BlockSpec((wi, wt_tile), lambda i, j: (0, j)),       # A_w^T
                pl.BlockSpec((bb, hi, wi), lambda i, j: (i, 0, 0)),     # input
                pl.BlockSpec((bb, ht, wt_tile), lambda i, j: (i, 0, j)),  # target
            ],
            out_specs=pl.BlockSpec((1, bb, ht), lambda i, j: (i, 0, 0)),
            scratch_shapes=[pltpu.VMEM((bb, ht), jnp.float32)],
        ),
        compiler_params=pltpu.CompilerParams(
            dimension_semantics=("parallel", "arbitrary")),
    )(a_h, a_wt, x, t)

    # Padded slices/columns are exactly zero; mean over the real N*C*Ht norms.
    return jnp.sum(norms) / (b * ht)


def multi_scale_end_point_error(input_flow, target_flow, weights=None):
    """Forward pass of MultiScaleEndPointError."""
    if not isinstance(input_flow, (tuple, list)):
        input_flow = [input_flow]
    if weights is None:
        weights = [1]
    loss = 0.0
    for out, w in zip(input_flow, weights):
        loss = loss + w * end_point_error(out, target_flow)
    return loss


def _ref_epe(input_flow, target_flow):
    """Pure-JAX reference (same math, no Pallas) for verification."""
    ht, wt = target_flow.shape[2:]
    hi, wi = input_flow.shape[2:]
    a_h = _interp_matrix(ht, hi)
    a_w = _interp_matrix(wt, wi)
    up = jnp.einsum('ph,nchw,qw->ncpq', a_h, input_flow.astype(jnp.float32), a_w)
    diff = up - target_flow.astype(jnp.float32)
    return jnp.mean(jnp.sqrt(jnp.sum(diff * diff, axis=-1)))


if __name__ == "__main__":
    key = jax.random.PRNGKey(0)
    k1, k2, k3 = jax.random.split(key, 3)
    # Multi-scale flow predictions (coarse pyramids) against a 16x16 target.
    target_flow = jax.random.normal(k3, (2, 2, 16, 16), dtype=jnp.float32)
    flow_s0 = jax.random.normal(k1, (2, 2, 8, 8), dtype=jnp.float32)
    flow_s1 = jax.random.normal(k2, (2, 2, 4, 4), dtype=jnp.float32)
    weights = [0.8, 0.2]

    loss = multi_scale_end_point_error([flow_s0, flow_s1], target_flow, weights)
    loss = jax.block_until_ready(loss)

    ref = (weights[0] * _ref_epe(flow_s0, target_flow)
           + weights[1] * _ref_epe(flow_s1, target_flow))
    ref = jax.block_until_ready(ref)

    assert jnp.allclose(loss, ref, rtol=1e-4, atol=1e-4), (loss, ref)
    print("KERNEL_OK")
</pallas_src>

<mosaic_0001>
module attributes {stable_mosaic.version = 11 : i64} {
  func.func @_epe_kernel(%arg0: i32, %arg1: i32, %arg2: memref<16x8xf32, #tpu.memory_space<vmem>>, %arg3: memref<8x16xf32, #tpu.memory_space<vmem>>, %arg4: memref<4x8x8xf32, #tpu.memory_space<vmem>>, %arg5: memref<4x16x16xf32, #tpu.memory_space<vmem>>, %arg6: memref<1x4x16xf32, #tpu.memory_space<vmem>>, %arg7: memref<4x16xf32, #tpu.memory_space<vmem>>) attributes {dimension_semantics = [#tpu.dimension_semantics<parallel>, #tpu.dimension_semantics<arbitrary>], iteration_bounds = array<i64: 1, 1>, scalar_prefetch = 0 : i64, scratch_operands = 1 : i64, tpu.core_type = #tpu.core_type<tc>, window_params = [{pipeline_mode = #tpu.pipeline_mode<synchronous>, transform_indices = @transform_0, window_bounds = array<i64: 16, 8>}, {transform_indices = @transform_1, window_bounds = array<i64: 8, 16>}, {transform_indices = @transform_2, window_bounds = array<i64: 4, 8, 8>}, {transform_indices = @transform_3, window_bounds = array<i64: 4, 16, 16>}, {transform_indices = @transform_4, window_bounds = array<i64: 1, 4, 16>}]} {
    %c0_i32 = arith.constant 0 : i32
    %0 = arith.cmpi eq, %arg1, %c0_i32 : i32
    %1 = arith.extui %0 : i1 to i32
    %c0_i32_0 = arith.constant 0 : i32
    %2 = arith.cmpi ne, %1, %c0_i32_0 : i32
    scf.if %2 {
      %cst_18 = arith.constant 0.000000e+00 : f32
      %22 = vector.broadcast %cst_18 : f32 to vector<4x16xf32>
      %c0_19 = arith.constant 0 : index
      %c0_20 = arith.constant 0 : index
      %23 = vector.load %arg7[%c0_19, %c0_20] : memref<4x16xf32, #tpu.memory_space<vmem>>, vector<4x16xf32>
      tpu.vector_store %arg7[%c0_19, %c0_20], %22 {strides = array<i32>} : memref<4x16xf32, #tpu.memory_space<vmem>>, vector<4x16xf32>,
    } else {
    }
    %c0 = arith.constant 0 : index
    %c0_1 = arith.constant 0 : index
    %c0_2 = arith.constant 0 : index
    %3 = vector.load %arg4[%c0, %c0_1, %c0_2] : memref<4x8x8xf32, #tpu.memory_space<vmem>>, vector<4x8x8xf32>
    %4 = vector.shape_cast %3 : vector<4x8x8xf32> to vector<32x8xf32>
    %c0_3 = arith.constant 0 : index
    %c0_4 = arith.constant 0 : index
    %5 = vector.load %arg3[%c0_3, %c0_4] : memref<8x16xf32, #tpu.memory_space<vmem>>, vector<8x16xf32>
    %cst = arith.constant dense<0.000000e+00> : vector<32x16xf32>
    %6 = tpu.matmul %4, %5, %cst {dimension_numbers = #tpu.dot_dimension_numbers<[1], [0], [0], [1], [0, 0, 1, 1], [], []>} : vector<32x8xf32>, vector<8x16xf32>, vector<32x16xf32> -> vector<32x16xf32>
    %7 = vector.shape_cast %6 : vector<32x16xf32> to vector<4x8x16xf32>
    %c0_5 = arith.constant 0 : index
    %c0_6 = arith.constant 0 : index
    %8 = vector.load %arg2[%c0_5, %c0_6] : memref<16x8xf32, #tpu.memory_space<vmem>>, vector<16x8xf32>
    %9 = vector.shape_cast %8 : vector<16x8xf32> to vector<1x16x8xf32>
    %10 = vector.broadcast %9 : vector<1x16x8xf32> to vector<4x16x8xf32>
    %cst_7 = arith.constant dense<0.000000e+00> : vector<4x16x16xf32>
    %11 = tpu.matmul %10, %7, %cst_7 {dimension_numbers = #tpu.dot_dimension_numbers<[2], [1], [1], [2], [0, 0, 0, 1, 1, 2], [0], [0]>} : vector<4x16x8xf32>, vector<4x8x16xf32>, vector<4x16x16xf32> -> vector<4x16x16xf32>
    %c0_8 = arith.constant 0 : index
    %c0_9 = arith.constant 0 : index
    %c0_10 = arith.constant 0 : index
    %12 = vector.load %arg5[%c0_8, %c0_9, %c0_10] : memref<4x16x16xf32, #tpu.memory_space<vmem>>, vector<4x16x16xf32>
    %13 = arith.subf %11, %12 : vector<4x16x16xf32>
    %c0_11 = arith.constant 0 : index
    %c0_12 = arith.constant 0 : index
    %14 = vector.load %arg7[%c0_11, %c0_12] : memref<4x16xf32, #tpu.memory_space<vmem>>, vector<4x16xf32>
    %15 = arith.mulf %13, %13 : vector<4x16x16xf32>
    %cst_13 = arith.constant dense<0.000000e+00> : vector<4x16xf32>
    %16 = vector.multi_reduction <add>, %15, %cst_13 [2] : vector<4x16x16xf32> to vector<4x16xf32>
    %17 = arith.addf %14, %16 : vector<4x16xf32>
    %c0_14 = arith.constant 0 : index
    %c0_15 = arith.constant 0 : index
    %18 = vector.load %arg7[%c0_14, %c0_15] : memref<4x16xf32, #tpu.memory_space<vmem>>, vector<4x16xf32>
    tpu.vector_store %arg7[%c0_14, %c0_15], %17 {strides = array<i32>} : memref<4x16xf32, #tpu.memory_space<vmem>>, vector<4x16xf32>,
    %c0_i32_16 = arith.constant 0 : i32
    %19 = arith.cmpi eq, %arg1, %c0_i32_16 : i32
    %20 = arith.extui %19 : i1 to i32
    %c0_i32_17 = arith.constant 0 : i32
    %21 = arith.cmpi ne, %20, %c0_i32_17 : i32
    scf.if %21 {
      %c0_18 = arith.constant 0 : index
      %c0_19 = arith.constant 0 : index
      %22 = vector.load %arg7[%c0_18, %c0_19] : memref<4x16xf32, #tpu.memory_space<vmem>>, vector<4x16xf32>
      %23 = math.sqrt %22 : vector<4x16xf32>
      %24 = vector.shape_cast %23 : vector<4x16xf32> to vector<1x4x16xf32>
      %c0_20 = arith.constant 0 : index
      %c0_21 = arith.constant 0 : index
      %c0_22 = arith.constant 0 : index
      %25 = vector.load %arg6[%c0_20, %c0_21, %c0_22] : memref<1x4x16xf32, #tpu.memory_space<vmem>>, vector<1x4x16xf32>
      tpu.vector_store %arg6[%c0_20, %c0_21, %c0_22], %24 {strides = array<i32>} : memref<1x4x16xf32, #tpu.memory_space<vmem>>, vector<1x4x16xf32>,
    } else {
    }
    return
  }
  func.func @transform_0(%arg0: i32, %arg1: i32) -> (i32, i32) {
    %c0_i32 = arith.constant 0 : i32
    %c0_i32_0 = arith.constant 0 : i32
    %c0_i32_1 = arith.constant 0 : i32
    return %c0_i32, %c0_i32_0 : i32, i32
  }
  func.func @transform_1(%arg0: i32, %arg1: i32) -> (i32, i32) {
    %c0_i32 = arith.constant 0 : i32
    %c0_i32_0 = arith.constant 0 : i32
    return %c0_i32, %arg1 : i32, i32
  }
  func.func @transform_2(%arg0: i32, %arg1: i32) -> (i32, i32, i32) {
    %c0_i32 = arith.constant 0 : i32
    %c0_i32_0 = arith.constant 0 : i32
    %c0_i32_1 = arith.constant 0 : i32
    return %arg0, %c0_i32, %c0_i32_0 : i32, i32, i32
  }
  func.func @transform_3(%arg0: i32, %arg1: i32) -> (i32, i32, i32) {
    %c0_i32 = arith.constant 0 : i32
    %c0_i32_0 = arith.constant 0 : i32
    return %arg0, %c0_i32, %arg1 : i32, i32, i32
  }
  func.func @transform_4(%arg0: i32, %arg1: i32) -> (i32, i32, i32) {
    %c0_i32 = arith.constant 0 : i32
    %c0_i32_0 = arith.constant 0 : i32
    %c0_i32_1 = arith.constant 0 : i32
    return %arg0, %c0_i32, %c0_i32_0 : i32, i32, i32
  }
}

</mosaic_0001>

<llo_original>
// kernel: tpu_custom_call.1
$region0: #{tpu_custom_call.1}
  #allocation0 [shape = 'u32[]', space=smem, size = 0x4, offset = 0x4, fixed_abs, tag = 'smem constant byte address 0x4 - core index']
  #allocation1 [shape = 'u32[144,128]{1,0:T(1,128)}', space=vmem, size = 0x12000, scoped, tag = 'internal scratch']
  #allocation2 [shape = 'f32[4,16]{1,0:T(4,128)}', space=vmem, size = 0x800, scoped, tag = 'scratch operand']
  %s0 = inlined_call_operand.vmem [shape: f32[16,8], index: 0, kind: input, shape index: {}]
  %s1 = inlined_call_operand.vmem [shape: f32[8,16], index: 1, kind: input, shape index: {}]
  %s2 = inlined_call_operand.hbm [shape: f32[4,8,8], index: 2, kind: input, shape index: {}]
  %s3 = inlined_call_operand.hbm [shape: f32[4,16,16], index: 3, kind: input, shape index: {}]
  %s4 = inlined_call_operand.hbm [shape: f32[1,4,16], index: 4, kind: output, shape index: {}]
  %s5 = sld [smem:[#allocation0]]
  $region42: #{tpu_custom_call.1} parent=0
    _
  %s7 = ssub.s32 1, %s5
  %s8 = scalar_select 0, %s7, %s5
  $region1: #{tpu_custom_call.1} parent=0
    #allocation3 [shape = 'u8[16384]{0}', space=vmem, size = 0x4000, scoped, tag = 'input window, operand 2, single buffered']
    #allocation4 [shape = 's32[1]{0}', space=sflag, size = 0x4, scoped, tag = 'scoped memory for tpu_custom_call.1']
    #allocation5 [shape = 's32[1]{0}', space=sflag, size = 0x4, scoped, tag = 'scoped memory for tpu_custom_call.1']
    #allocation6 [shape = 'u8[32768]{0}', space=vmem, size = 0x8000, scoped, tag = 'input window, operand 3, single buffered']
    #allocation7 [shape = 's32[1]{0}', space=sflag, size = 0x4, scoped, tag = 'scoped memory for tpu_custom_call.1']
    #allocation8 [shape = 'u8[2048]{0}', space=vmem, size = 0x800, scoped, tag = 'output window, operand 0, single buffered']
    %9 = vsyncpa [#allocation4], 0
    %10 = vsyncpa [#allocation7], 0
    %11 = vsyncpa [#allocation5], 0
    // Predicated region
    $region2: #{tpu_custom_call.1} parent=1 // pred_check
      _
    $region3: #{tpu_custom_call.1} parent=1 // pred_check_branch
      %13 = sbr.rel (0) target = $region5
    $region4: #{tpu_custom_call.1} parent=1 // pred_region
      _
    $region5: #{tpu_custom_call.1} parent=1 // pred_fallthru
      _
    // Predicated region
    $region6: #{tpu_custom_call.1} parent=1 // pred_check
      _
    $region7: #{tpu_custom_call.1} parent=1 // pred_check_branch
      %15 = sbr.rel (0) target = $region9
    $region8: #{tpu_custom_call.1} parent=1 // pred_region
      _
    $region9: #{tpu_custom_call.1} parent=1 // pred_fallthru
      _
    // Predicated region
    $region10: #{tpu_custom_call.1} parent=1 // pred_check
      _
    $region11: #{tpu_custom_call.1} parent=1 // pred_check_branch
      %17 = sbr.rel (0) target = $region13
    $region12: #{tpu_custom_call.1} parent=1 // pred_region
      %s19 = ssub.s32 512, 512
      %20 = vsyncadd [#allocation4], %s19
      %s21 = sshll.u32 [#allocation3], 4
      %s22 = int_to_ptr.vmem [resolvable:$true] %s21
      %27 = dma.hbm_to_vmem [thread:$0]  %s2, 512, %s22, [#allocation4], 128, 128, 8
    $region13: #{tpu_custom_call.1} parent=1 // pred_fallthru
      _
    // Predicated region
    $region14: #{tpu_custom_call.1} parent=1 // pred_check
      _
    $region15: #{tpu_custom_call.1} parent=1 // pred_check_branch
      %29 = sbr.rel (0) target = $region17
    $region16: #{tpu_custom_call.1} parent=1 // pred_region
      %s31 = ssub.s32 1024, 1024
      %32 = vsyncadd [#allocation7], %s31
      %s33 = sshll.u32 [#allocation6], 4
      %s34 = int_to_ptr.vmem [resolvable:$true] %s33
      %39 = dma.hbm_to_vmem [thread:$0]  %s3, 1024, %s34, [#allocation7], 128, 128, 8
    $region17: #{tpu_custom_call.1} parent=1 // pred_fallthru
      _
    // Predicated region
    $region18: #{tpu_custom_call.1} parent=1 // pred_check
      _
    $region19: #{tpu_custom_call.1} parent=1 // pred_check_branch
      %41 = sbr.rel (0) target = $region21
    $region20: #{tpu_custom_call.1} parent=1 // pred_region
      %42 = dma.done [#allocation4], 512
    $region21: #{tpu_custom_call.1} parent=1 // pred_fallthru
      _
    // Predicated region
    $region22: #{tpu_custom_call.1} parent=1 // pred_check
      _
    $region23: #{tpu_custom_call.1} parent=1 // pred_check_branch
      %44 = sbr.rel (0) target = $region25
    $region24: #{tpu_custom_call.1} parent=1 // pred_region
      %45 = dma.done [#allocation7], 1024
    $region25: #{tpu_custom_call.1} parent=1 // pred_fallthru
      _
    %p46 = scmp.eq.s32.totalorder 0, 0
    // Predicated region
    $region26: #{tpu_custom_call.1} parent=1 // pred_check
      %p47 = pneg %p46
    $region27: #{tpu_custom_call.1} parent=1 // pred_check_branch
      %49 = sbr.rel (%p47) target = $region29
    $region28: #{tpu_custom_call.1} parent=1 // pred_region
      %vm50 = vcmask 125952
      %51 = vst.msk [vmem:[#allocation2] sm:$0xf] %vm50, 0.0
    $region29: #{tpu_custom_call.1} parent=1 // pred_fallthru
      _
    %v52 = vld [vmem:[#allocation3] sm:$0xff]
    %v53 = vld [vmem:[#allocation3 + $0x8] sm:$0xff]
    %v54 = vld [vmem:[#allocation3 + $0x10] sm:$0xff]
    %v55 = vld [vmem:[#allocation3 + $0x18] sm:$0xff]
    %v56 = vld [vmem:[%s1] sm:$0xff]
    %vm57 = vcmask 64512
    %v59 = vsel %vm57, %v52, 0
    %v62 = vsel %vm57, %v53, 0
    %v65 = vsel %vm57, %v54, 0
    %v68 = vsel %vm57, %v55, 0
    %70 = vmatprep.subr.mxu0 0.0
    %71 = vmatpush1.msra.mxu0 %v56
    %72 = vmatprep.subr.mxu0 0.0
    %73 = vmatpush1.msra.mxu0 0.0
    %74 = vmatprep.subr.mxu0 0.0
    %75 = vmatpush1.msra.mxu0 0.0
    %76 = vmatprep.subr.mxu0 0.0
    %77 = vmatpush1.msra.mxu0 0.0
    %78 = vmatprep.subr.mxu0 0.0
    %79 = vmatpush1.msra.mxu0 0.0
    %80 = vmatprep.subr.mxu0 0.0
    %81 = vmatpush1.msra.mxu0 0.0
    %82 = vmatprep.subr.mxu0 0.0
    %83 = vmatpush1.msra.mxu0 0.0
    %84 = vmatprep.subr.mxu0 0.0
    %85 = vmatpush1.msra.mxu0 0.0
    %86 = vmatprep.subr.mxu0 0.0
    %87 = vmatpush1.msra.mxu0 0.0
    %88 = vmatprep.subr.mxu0 0.0
    %89 = vmatpush1.msra.mxu0 0.0
    %90 = vmatprep.subr.mxu0 0.0
    %91 = vmatpush1.msra.mxu0 0.0
    %92 = vmatprep.subr.mxu0 0.0
    %93 = vmatpush1.msra.mxu0 0.0
    %94 = vmatprep.subr.mxu0 0.0
    %95 = vmatpush1.msra.mxu0 0.0
    %96 = vmatprep.subr.mxu0 0.0
    %97 = vmatpush1.msra.mxu0 0.0
    %98 = vmatprep.subr.mxu0 0.0
    %99 = vmatpush1.msra.mxu0 0.0
    %100 = vmatprep.subr.mxu0 0.0
    %101 = vmatpush1.msra.mxu0 0.0
    %102 = vmatprep.subr.mxu0 0.0
    %103 = vmatpush1.msra.mxu0 0.0
    %104 = vmatprep.subr.mxu0 0.0
    %105 = vmatpush1.msra.mxu0 0.0
    %106 = vmatprep.subr.mxu0 0.0
    %107 = vmatpush1.msra.mxu0 0.0
    %108 = vmatprep.subr.mxu0 0.0
    %109 = vmatpush1.msra.mxu0 0.0
    %110 = vmatprep.subr.mxu0 0.0
    %111 = vmatpush1.msra.mxu0 0.0
    %112 = vmatprep.subr.mxu0 0.0
    %113 = vmatpush1.msra.mxu0 0.0
    %114 = vmatprep.subr.mxu0 0.0
    %115 = vmatpush1.msra.mxu0 0.0
    %116 = vmatprep.subr.mxu0 0.0
    %117 = vmatpush1.msra.mxu0 0.0
    %118 = vmatprep.subr.mxu0 0.0
    %119 = vmatpush1.msra.mxu0 0.0
    %120 = vmatprep.subr.mxu0 0.0
    %121 = vmatpush1.msra.mxu0 0.0
    %122 = vmatprep.subr.mxu0 0.0
    %123 = vmatpush1.msra.mxu0 0.0
    %124 = vmatprep.subr.mxu0 0.0
    %125 = vmatpush1.msra.mxu0 0.0
    %126 = vmatprep.subr.mxu0 0.0
    %127 = vmatpush1.msra.mxu0 0.0
    %128 = vmatprep.subr.mxu0 0.0
    %129 = vmatpush1.msra.mxu0 0.0
    %130 = vmatprep.subr.mxu0 0.0
    %131 = vmatpush1.msra.mxu0 0.0
    %132 = vmatprep.subr.mxu0 0.0
    %133 = vmatpush1.msra.mxu0 0.0
    %134 = vmatprep.mubr.f32.mxu0 0.0
    %135 = vmatmul.mubr.f32.gmra.mrb[0].mxu0 %v59
    %v136 = vpop.f32.mrb[0].mxu0
    %v137 = vadd.f32 0.0, %v136
    %v138 = vpop.f32.mrb[0].mxu0
    %139 = vmatprep.mubr.f32.mxu0 0.0
    %140 = vmatmul.mubr.f32.gmra.mrb[0].mxu0 %v62
    %v141 = vpop.f32.mrb[0].mxu0
    %v142 = vadd.f32 0.0, %v141
    %v143 = vpop.f32.mrb[0].mxu0
    %144 = vmatprep.mubr.f32.mxu0 0.0
    %145 = vmatmul.mubr.f32.gmra.mrb[0].mxu0 %v65
    %v146 = vpop.f32.mrb[0].mxu0
    %v147 = vadd.f32 0.0, %v146
    %v148 = vpop.f32.mrb[0].mxu0
    %149 = vmatprep.mubr.f32.mxu0 0.0
    %150 = vmatmul.mubr.f32.gmra.mrb[0].mxu0 %v68
    %v151 = vpop.f32.mrb[0].mxu0
    %v152 = vadd.f32 0.0, %v151
    %v153 = vpop.f32.mrb[0].mxu0
    %154 = vdwg.mxu0
    %v155 = vld [vmem:[%s0] sm:$0xff]
    %v156 = vld [vmem:[%s0 + $0x8] sm:$0xff]
    %v158 = vsel %vm57, %v155, 0
    %v161 = vsel %vm57, %v156, 0
    %163 = vmatprep.subr.mxu0 0.0
    %164 = vmatpush1.msra.mxu0 %v137
    %165 = vmatprep.subr.mxu0 0.0
    %166 = vmatpush1.msra.mxu0 0.0
    %167 = vmatprep.subr.mxu0 0.0
    %168 = vmatpush1.msra.mxu0 0.0
    %169 = vmatprep.subr.mxu0 0.0
    %170 = vmatpush1.msra.mxu0 0.0
    %171 = vmatprep.subr.mxu0 0.0
    %172 = vmatpush1.msra.mxu0 0.0
    %173 = vmatprep.subr.mxu0 0.0
    %174 = vmatpush1.msra.mxu0 0.0
    %175 = vmatprep.subr.mxu0 0.0
    %176 = vmatpush1.msra.mxu0 0.0
    %177 = vmatprep.subr.mxu0 0.0
    %178 = vmatpush1.msra.mxu0 0.0
    %179 = vmatprep.subr.mxu0 0.0
    %180 = vmatpush1.msra.mxu0 0.0
    %181 = vmatprep.subr.mxu0 0.0
    %182 = vmatpush1.msra.mxu0 0.0
    %183 = vmatprep.subr.mxu0 0.0
    %184 = vmatpush1.msra.mxu0 0.0
    %185 = vmatprep.subr.mxu0 0.0
    %186 = vmatpush1.msra.mxu0 0.0
    %187 = vmatprep.subr.mxu0 0.0
    %188 = vmatpush1.msra.mxu0 0.0
    %189 = vmatprep.subr.mxu0 0.0
    %190 = vmatpush1.msra.mxu0 0.0
    %191 = vmatprep.subr.mxu0 0.0
    %192 = vmatpush1.msra.mxu0 0.0
    %193 = vmatprep.subr.mxu0 0.0
    %194 = vmatpush1.msra.mxu0 0.0
    %195 = vmatprep.subr.mxu0 0.0
    %196 = vmatpush1.msra.mxu0 0.0
    %197 = vmatprep.subr.mxu0 0.0
    %198 = vmatpush1.msra.mxu0 0.0
    %199 = vmatprep.subr.mxu0 0.0
    %200 = vmatpush1.msra.mxu0 0.0
    %201 = vmatprep.subr.mxu0 0.0
    %202 = vmatpush1.msra.mxu0 0.0
    %203 = vmatprep.subr.mxu0 0.0
    %204 = vmatpush1.msra.mxu0 0.0
    %205 = vmatprep.subr.mxu0 0.0
    %206 = vmatpush1.msra.mxu0 0.0
    %207 = vmatprep.subr.mxu0 0.0
    %208 = vmatpush1.msra.mxu0 0.0
    %209 = vmatprep.subr.mxu0 0.0
    %210 = vmatpush1.msra.mxu0 0.0
    %211 = vmatprep.subr.mxu0 0.0
    %212 = vmatpush1.msra.mxu0 0.0
    %213 = vmatprep.subr.mxu0 0.0
    %214 = vmatpush1.msra.mxu0 0.0
    %215 = vmatprep.subr.mxu0 0.0
    %216 = vmatpush1.msra.mxu0 0.0
    %217 = vmatprep.subr.mxu0 0.0
    %218 = vmatpush1.msra.mxu0 0.0
    %219 = vmatprep.subr.mxu0 0.0
    %220 = vmatpush1.msra.mxu0 0.0
    %221 = vmatprep.subr.mxu0 0.0
    %222 = vmatpush1.msra.mxu0 0.0
    %223 = vmatprep.subr.mxu0 0.0
    %224 = vmatpush1.msra.mxu0 0.0
    %225 = vmatprep.subr.mxu0 0.0
    %226 = vmatpush1.msra.mxu0 0.0
    %227 = vmatprep.mubr.f32.mxu0 0.0
    %228 = vmatmul.mubr.f32.gmra.mrb[0].mxu0 %v158
    %v229 = vpop.f32.mrb[0].mxu0
    %v230 = vadd.f32 0.0, %v229
    %v231 = vpop.f32.mrb[0].mxu0
    %232 = vmatprep.mubr.f32.mxu0 0.0
    %233 = vmatmul.mubr.f32.gmra.mrb[0].mxu0 %v161
    %v234 = vpop.f32.mrb[0].mxu0
    %v235 = vadd.f32 0.0, %v234
    %v236 = vpop.f32.mrb[0].mxu0
    %237 = vdwg.mxu0
    %238 = vmatprep.subr.mxu0 0.0
    %239 = vmatpush1.msra.mxu0 %v142
    %240 = vmatprep.subr.mxu0 0.0
    %241 = vmatpush1.msra.mxu0 0.0
    %242 = vmatprep.subr.mxu0 0.0
    %243 = vmatpush1.msra.mxu0 0.0
    %244 = vmatprep.subr.mxu0 0.0
    %245 = vmatpush1.msra.mxu0 0.0
    %246 = vmatprep.subr.mxu0 0.0
    %247 = vmatpush1.msra.mxu0 0.0
    %248 = vmatprep.subr.mxu0 0.0
    %249 = vmatpush1.msra.mxu0 0.0
    %250 = vmatprep.subr.mxu0 0.0
    %251 = vmatpush1.msra.mxu0 0.0
    %252 = vmatprep.subr.mxu0 0.0
    %253 = vmatpush1.msra.mxu0 0.0
    %254 = vmatprep.subr.mxu0 0.0
    %255 = vmatpush1.msra.mxu0 0.0
    %256 = vmatprep.subr.mxu0 0.0
    %257 = vmatpush1.msra.mxu0 0.0
    %258 = vmatprep.subr.mxu0 0.0
    %259 = vmatpush1.msra.mxu0 0.0
    %260 = vmatprep.subr.mxu0 0.0
    %261 = vmatpush1.msra.mxu0 0.0
    %262 = vmatprep.subr.mxu0 0.0
    %263 = vmatpush1.msra.mxu0 0.0
    %264 = vmatprep.subr.mxu0 0.0
    %265 = vmatpush1.msra.mxu0 0.0
    %266 = vmatprep.subr.mxu0 0.0
    %267 = vmatpush1.msra.mxu0 0.0
    %268 = vmatprep.subr.mxu0 0.0
    %269 = vmatpush1.msra.mxu0 0.0
    %270 = vmatprep.subr.mxu0 0.0
    %271 = vmatpush1.msra.mxu0 0.0
    %272 = vmatprep.subr.mxu0 0.0
    %273 = vmatpush1.msra.mxu0 0.0
    %274 = vmatprep.subr.mxu0 0.0
    %275 = vmatpush1.msra.mxu0 0.0
    %276 = vmatprep.subr.mxu0 0.0
    %277 = vmatpush1.msra.mxu0 0.0
    %278 = vmatprep.subr.mxu0 0.0
    %279 = vmatpush1.msra.mxu0 0.0
    %280 = vmatprep.subr.mxu0 0.0
    %281 = vmatpush1.msra.mxu0 0.0
    %282 = vmatprep.subr.mxu0 0.0
    %283 = vmatpush1.msra.mxu0 0.0
    %284 = vmatprep.subr.mxu0 0.0
    %285 = vmatpush1.msra.mxu0 0.0
    %286 = vmatprep.subr.mxu0 0.0
    %287 = vmatpush1.msra.mxu0 0.0
    %288 = vmatprep.subr.mxu0 0.0
    %289 = vmatpush1.msra.mxu0 0.0
    %290 = vmatprep.subr.mxu0 0.0
    %291 = vmatpush1.msra.mxu0 0.0
    %292 = vmatprep.subr.mxu0 0.0
    %293 = vmatpush1.msra.mxu0 0.0
    %294 = vmatprep.subr.mxu0 0.0
    %295 = vmatpush1.msra.mxu0 0.0
    %296 = vmatprep.subr.mxu0 0.0
    %297 = vmatpush1.msra.mxu0 0.0
    %298 = vmatprep.subr.mxu0 0.0
    %299 = vmatpush1.msra.mxu0 0.0
    %300 = vmatprep.subr.mxu0 0.0
    %301 = vmatpush1.msra.mxu0 0.0
    %302 = vmatprep.mubr.f32.mxu0 0.0
    %303 = vmatmul.mubr.f32.gmra.mrb[0].mxu0 %v158
    %v304 = vpop.f32.mrb[0].mxu0
    %v305 = vadd.f32 0.0, %v304
    %v306 = vpop.f32.mrb[0].mxu0
    %307 = vmatprep.mubr.f32.mxu0 0.0
    %308 = vmatmul.mubr.f32.gmra.mrb[0].mxu0 %v161
    %v309 = vpop.f32.mrb[0].mxu0
    %v310 = vadd.f32 0.0, %v309
    %v311 = vpop.f32.mrb[0].mxu0
    %312 = vdwg.mxu0
    %313 = vmatprep.subr.mxu0 0.0
    %314 = vmatpush1.msra.mxu0 %v147
    %315 = vmatprep.subr.mxu0 0.0
    %316 = vmatpush1.msra.mxu0 0.0
    %317 = vmatprep.subr.mxu0 0.0
    %318 = vmatpush1.msra.mxu0 0.0
    %319 = vmatprep.subr.mxu0 0.0
    %320 = vmatpush1.msra.mxu0 0.0
    %321 = vmatprep.subr.mxu0 0.0
    %322 = vmatpush1.msra.mxu0 0.0
    %323 = vmatprep.subr.mxu0 0.0
    %324 = vmatpush1.msra.mxu0 0.0
    %325 = vmatprep.subr.mxu0 0.0
    %326 = vmatpush1.msra.mxu0 0.0
    %327 = vmatprep.subr.mxu0 0.0
    %328 = vmatpush1.msra.mxu0 0.0
    %329 = vmatprep.subr.mxu0 0.0
    %330 = vmatpush1.msra.mxu0 0.0
    %331 = vmatprep.subr.mxu0 0.0
    %332 = vmatpush1.msra.mxu0 0.0
    %333 = vmatprep.subr.mxu0 0.0
    %334 = vmatpush1.msra.mxu0 0.0
    %335 = vmatprep.subr.mxu0 0.0
    %336 = vmatpush1.msra.mxu0 0.0
    %337 = vmatprep.subr.mxu0 0.0
    %338 = vmatpush1.msra.mxu0 0.0
    %339 = vmatprep.subr.mxu0 0.0
    %340 = vmatpush1.msra.mxu0 0.0
    %341 = vmatprep.subr.mxu0 0.0
    %342 = vmatpush1.msra.mxu0 0.0
    %343 = vmatprep.subr.mxu0 0.0
    %344 = vmatpush1.msra.mxu0 0.0
    %345 = vmatprep.subr.mxu0 0.0
    %346 = vmatpush1.msra.mxu0 0.0
    %347 = vmatprep.subr.mxu0 0.0
    %348 = vmatpush1.msra.mxu0 0.0
    %349 = vmatprep.subr.mxu0 0.0
    %350 = vmatpush1.msra.mxu0 0.0
    %351 = vmatprep.subr.mxu0 0.0
    %352 = vmatpush1.msra.mxu0 0.0
    %353 = vmatprep.subr.mxu0 0.0
    %354 = vmatpush1.msra.mxu0 0.0
    %355 = vmatprep.subr.mxu0 0.0
    %356 = vmatpush1.msra.mxu0 0.0
    %357 = vmatprep.subr.mxu0 0.0
    %358 = vmatpush1.msra.mxu0 0.0
    %359 = vmatprep.subr.mxu0 0.0
    %360 = vmatpush1.msra.mxu0 0.0
    %361 = vmatprep.subr.mxu0 0.0
    %362 = vmatpush1.msra.mxu0 0.0
    %363 = vmatprep.subr.mxu0 0.0
    %364 = vmatpush1.msra.mxu0 0.0
    %365 = vmatprep.subr.mxu0 0.0
    %366 = vmatpush1.msra.mxu0 0.0
    %367 = vmatprep.subr.mxu0 0.0
    %368 = vmatpush1.msra.mxu0 0.0
    %369 = vmatprep.subr.mxu0 0.0
    %370 = vmatpush1.msra.mxu0 0.0
    %371 = vmatprep.subr.mxu0 0.0
    %372 = vmatpush1.msra.mxu0 0.0
    %373 = vmatprep.subr.mxu0 0.0
    %374 = vmatpush1.msra.mxu0 0.0
    %375 = vmatprep.subr.mxu0 0.0
    %376 = vmatpush1.msra.mxu0 0.0
    %377 = vmatprep.mubr.f32.mxu0 0.0
    %378 = vmatmul.mubr.f32.gmra.mrb[0].mxu0 %v158
    %v379 = vpop.f32.mrb[0].mxu0
    %v380 = vadd.f32 0.0, %v379
    %v381 = vpop.f32.mrb[0].mxu0
    %382 = vmatprep.mubr.f32.mxu0 0.0
    %383 = vmatmul.mubr.f32.gmra.mrb[0].mxu0 %v161
    %v384 = vpop.f32.mrb[0].mxu0
    %v385 = vadd.f32 0.0, %v384
    %v386 = vpop.f32.mrb[0].mxu0
    %387 = vdwg.mxu0
    %388 = vmatprep.subr.mxu0 0.0
    %389 = vmatpush1.msra.mxu0 %v152
    %390 = vmatprep.subr.mxu0 0.0
    %391 = vmatpush1.msra.mxu0 0.0
    %392 = vmatprep.subr.mxu0 0.0
    %393 = vmatpush1.msra.mxu0 0.0
    %394 = vmatprep.subr.mxu0 0.0
    %395 = vmatpush1.msra.mxu0 0.0
    %396 = vmatprep.subr.mxu0 0.0
    %397 = vmatpush1.msra.mxu0 0.0
    %398 = vmatprep.subr.mxu0 0.0
    %399 = vmatpush1.msra.mxu0 0.0
    %400 = vmatprep.subr.mxu0 0.0
    %401 = vmatpush1.msra.mxu0 0.0
    %402 = vmatprep.subr.mxu0 0.0
    %403 = vmatpush1.msra.mxu0 0.0
    %404 = vmatprep.subr.mxu0 0.0
    %405 = vmatpush1.msra.mxu0 0.0
    %406 = vmatprep.subr.mxu0 0.0
    %407 = vmatpush1.msra.mxu0 0.0
    %408 = vmatprep.subr.mxu0 0.0
    %409 = vmatpush1.msra.mxu0 0.0
    %410 = vmatprep.subr.mxu0 0.0
    %411 = vmatpush1.msra.mxu0 0.0
    %412 = vmatprep.subr.mxu0 0.0
    %413 = vmatpush1.msra.mxu0 0.0
    %414 = vmatprep.subr.mxu0 0.0
    %415 = vmatpush1.msra.mxu0 0.0
    %416 = vmatprep.subr.mxu0 0.0
    %417 = vmatpush1.msra.mxu0 0.0
    %418 = vmatprep.subr.mxu0 0.0
    %419 = vmatpush1.msra.mxu0 0.0
    %420 = vmatprep.subr.mxu0 0.0
    %421 = vmatpush1.msra.mxu0 0.0
    %422 = vmatprep.subr.mxu0 0.0
    %423 = vmatpush1.msra.mxu0 0.0
    %424 = vmatprep.subr.mxu0 0.0
    %425 = vmatpush1.msra.mxu0 0.0
    %426 = vmatprep.subr.mxu0 0.0
    %427 = vmatpush1.msra.mxu0 0.0
    %428 = vmatprep.subr.mxu0 0.0
    %429 = vmatpush1.msra.mxu0 0.0
    %430 = vmatprep.subr.mxu0 0.0
    %431 = vmatpush1.msra.mxu0 0.0
    %432 = vmatprep.subr.mxu0 0.0
    %433 = vmatpush1.msra.mxu0 0.0
    %434 = vmatprep.subr.mxu0 0.0
    %435 = vmatpush1.msra.mxu0 0.0
    %436 = vmatprep.subr.mxu0 0.0
    %437 = vmatpush1.msra.mxu0 0.0
    %438 = vmatprep.subr.mxu0 0.0
    %439 = vmatpush1.msra.mxu0 0.0
    %440 = vmatprep.subr.mxu0 0.0
    %441 = vmatpush1.msra.mxu0 0.0
    %442 = vmatprep.subr.mxu0 0.0
    %443 = vmatpush1.msra.mxu0 0.0
    %444 = vmatprep.subr.mxu0 0.0
    %445 = vmatpush1.msra.mxu0 0.0
    %446 = vmatprep.subr.mxu0 0.0
    %447 = vmatpush1.msra.mxu0 0.0
    %448 = vmatprep.subr.mxu0 0.0
    %449 = vmatpush1.msra.mxu0 0.0
    %450 = vmatprep.subr.mxu0 0.0
    %451 = vmatpush1.msra.mxu0 0.0
    %452 = vmatprep.mubr.f32.mxu0 0.0
    %453 = vmatmul.mubr.f32.gmra.mrb[0].mxu0 %v158
    %v454 = vpop.f32.mrb[0].mxu0
    %v455 = vadd.f32 0.0, %v454
    %v456 = vpop.f32.mrb[0].mxu0
    %457 = vmatprep.mubr.f32.mxu0 0.0
    %458 = vmatmul.mubr.f32.gmra.mrb[0].mxu0 %v161
    %v459 = vpop.f32.mrb[0].mxu0
    %v460 = vadd.f32 0.0, %v459
    %v461 = vpop.f32.mrb[0].mxu0
    %462 = vdwg.mxu0
    %v463 = vld [vmem:[#allocation6] sm:$0xff]
    %v464 = vld [vmem:[#allocation6 + $0x8] sm:$0xff]
    %v465 = vld [vmem:[#allocation6 + $0x10] sm:$0xff]
    %v466 = vld [vmem:[#allocation6 + $0x18] sm:$0xff]
    %v467 = vld [vmem:[#allocation6 + $0x20] sm:$0xff]
    %v468 = vld [vmem:[#allocation6 + $0x28] sm:$0xff]
    %v469 = vld [vmem:[#allocation6 + $0x30] sm:$0xff]
    %v470 = vld [vmem:[#allocation6 + $0x38] sm:$0xff]
    %v471 = vsub.f32 %v230, %v463
    %v472 = vsub.f32 %v235, %v464
    %v473 = vsub.f32 %v305, %v465
    %v474 = vsub.f32 %v310, %v466
    %v475 = vsub.f32 %v380, %v467
    %v476 = vsub.f32 %v385, %v468
    %v477 = vsub.f32 %v455, %v469
    %v478 = vsub.f32 %v460, %v470
    %v479 = vld [vmem:[#allocation2] sm:$0xf]
    %v480 = vmul.f32 %v471, %v471
    %v481 = vmul.f32 %v472, %v472
    %v482 = vmul.f32 %v473, %v473
    %v483 = vmul.f32 %v474, %v474
    %v484 = vmul.f32 %v475, %v475
    %v485 = vmul.f32 %v476, %v476
    %v486 = vmul.f32 %v477, %v477
    %v487 = vmul.f32 %v478, %v478
    %vm488 = vcmask 130048
    %v489 = vsel %vm488, %v480, 0.0
    %490 = vadd.xlane.f32.xlu0 %v489
    %v491 = vpop.xlane.xlu0 %490
    %v492 = vsel %vm488, %v481, 0.0
    %493 = vadd.xlane.f32.xlu0 %v492
    %v494 = vpop.xlane.xlu0 %493
    %v495 = vsel %vm488, %v482, 0.0
    %496 = vadd.xlane.f32.xlu0 %v495
    %v497 = vpop.xlane.xlu0 %496
    %v498 = vsel %vm488, %v483, 0.0
    %499 = vadd.xlane.f32.xlu0 %v498
    %v500 = vpop.xlane.xlu0 %499
    %v501 = vsel %vm488, %v484, 0.0
    %502 = vadd.xlane.f32.xlu0 %v501
    %v503 = vpop.xlane.xlu0 %502
    %v504 = vsel %vm488, %v485, 0.0
    %505 = vadd.xlane.f32.xlu0 %v504
    %v506 = vpop.xlane.xlu0 %505
    %v507 = vsel %vm488, %v486, 0.0
    %508 = vadd.xlane.f32.xlu0 %v507
    %v509 = vpop.xlane.xlu0 %508
    %v510 = vsel %vm488, %v487, 0.0
    %511 = vadd.xlane.f32.xlu0 %v510
    %v512 = vpop.xlane.xlu0 %511
    %v521 = vlaneseq
    %v522 = vand.u32 %v521, 127
    %v523 = vlaneseq
    %v524 = vshrl.u32 %v523, 7
    %v525 = vsub.s32 %v522, %v524
    %v526 = vrot.slane %v491, %v525
    %v527 = vadd.s32 %v522, 4294967288
    %v528 = vlaneseq
    %v529 = vshrl.u32 %v528, 7
    %v530 = vsub.s32 %v527, %v529
    %v531 = vrot.slane %v494, %v530
    %vm532 = vcmask 130112
    %v533 = vsel %vm532, %v531, %v526
    %v534 = vlaneseq
    %v535 = vshrl.u32 %v534, 7
    %v536 = vsub.s32 %v522, %v535
    %v537 = vrot.slane %v497, %v536
    %v538 = vlaneseq
    %v539 = vshrl.u32 %v538, 7
    %v540 = vsub.s32 %v527, %v539
    %v541 = vrot.slane %v500, %v540
    %v542 = vsel %vm532, %v541, %v537
    %v543 = vlaneseq
    %v544 = vshrl.u32 %v543, 7
    %v545 = vsub.s32 %v522, %v544
    %v546 = vrot.slane %v503, %v545
    %v547 = vlaneseq
    %v548 = vshrl.u32 %v547, 7
    %v549 = vsub.s32 %v527, %v548
    %v550 = vrot.slane %v506, %v549
    %v551 = vsel %vm532, %v550, %v546
    %v552 = vlaneseq
    %v553 = vshrl.u32 %v552, 7
    %v554 = vsub.s32 %v522, %v553
    %v555 = vrot.slane %v509, %v554
    %v556 = vlaneseq
    %v557 = vshrl.u32 %v556, 7
    %v558 = vsub.s32 %v527, %v557
    %v559 = vrot.slane %v512, %v558
    %v560 = vsel %vm532, %v559, %v555
    %vm561 = vcmask 1041409
    %v562 = vsel %vm561, %v542, %v533
    %vm563 = vcmask 1042434
    %v564 = vsel %vm563, %v551, %v562
    %vm565 = vcmask 1043459
    %v566 = vsel %vm565, %v560, %v564
    %v568 = vadd.f32 %v479, %v566
    %vm569 = vcmask 125952
    %570 = vst.msk [vmem:[#allocation2] sm:$0xf] %vm569, %v568
    // Predicated region
    $region30: #{tpu_custom_call.1} parent=1 // pred_check
      %p571 = pneg %p46
    $region31: #{tpu_custom_call.1} parent=1 // pred_check_branch
      %573 = sbr.rel (%p571) target = $region33
    $region32: #{tpu_custom_call.1} parent=1 // pred_region
      %v574 = vld [vmem:[#allocation2] sm:$0xf]
      %v575 = vrsqrt.pop %v574
      %v576 = vmul.f32 %v574, %v575
      %vm577 = vcmp.eq.f32.partialorder %v574, inf
      %v578 = vsel %vm577, %v574, %v576
      %vm579 = vcmp.eq.f32.partialorder %v574, 0.0
      %v580 = vand.u32 %v574, 2147483648
      %v581 = vsel %vm579, %v580, %v578
      %582 = vst.msk [vmem:[#allocation8] sm:$0xf] %vm569, %v581
    $region33: #{tpu_custom_call.1} parent=1 // pred_fallthru
      _
    // Predicated region
    $region34: #{tpu_custom_call.1} parent=1 // pred_check
      _
    $region35: #{tpu_custom_call.1} parent=1 // pred_check_branch
      %584 = sbr.rel (0) target = $region37
    $region36: #{tpu_custom_call.1} parent=1 // pred_region
      %s586 = ssub.s32 64, 64
      %587 = vsyncadd [#allocation5], %s586
      %s589 = sshll.u32 [#allocation8], 4
      %s590 = int_to_ptr.vmem [resolvable:$true] %s589
      %592 = dma.vmem_to_hbm [thread:$0]  %s590, 64, %s4, [#allocation5]
    $region37: #{tpu_custom_call.1} parent=1 // pred_fallthru
      _
    // Predicated region
    $region38: #{tpu_custom_call.1} parent=1 // pred_check
      _
    $region39: #{tpu_custom_call.1} parent=1 // pred_check_branch
      %594 = sbr.rel (0) target = $region41
    $region40: #{tpu_custom_call.1} parent=1 // pred_region
      %595 = dma.done [#allocation5], 64
    $region41: #{tpu_custom_call.1} parent=1 // pred_fallthru
      _
    %596 = vsyncpa [#allocation4], 1
    %597 = vsyncpa [#allocation7], 1
    %598 = vsyncpa [#allocation5], 1

</llo_original>
